<compile_context>
chip_gen: v7x
topology: tpu7x:2x2x1
jax: 0.10.0
libtpu: 0.0.40
codegen_flags: <defaults>
</compile_context>

<pallas_src>
import functools

import jax
import jax.numpy as jnp
from jax.experimental import pallas as pl
from jax.experimental.pallas import tpu as pltpu

EPS = 1e-5


def bn_add_kernel(x_ref, res_ref, w_ref, b_ref, o_ref):
    # x_ref, res_ref, o_ref: (N, C_BLK, HW) ; w_ref, b_ref: (1, C_BLK, 1)
    x = x_ref[...].astype(jnp.float32)
    n, _, hw = x.shape
    inv_count = jnp.float32(1.0 / (n * hw))

    # One-pass per-channel batch statistics (biased variance == BN training fwd):
    # lane-axis reduce per channel row, then fold the (tiny) batch axis.
    sum_x = jnp.sum(jnp.sum(x, axis=-1, keepdims=True), axis=0, keepdims=True)
    sum_x2 = jnp.sum(jnp.sum(x * x, axis=-1, keepdims=True), axis=0, keepdims=True)

    mean = sum_x * inv_count                               # (1, C_BLK, 1)
    var = jnp.maximum(sum_x2 * inv_count - mean * mean, 0.0)
    inv_std = jax.lax.rsqrt(var + EPS)                     # EUP, ~free

    # Fold affine into one per-channel scale/shift (computed on (1,C_BLK,1)
    # vregs, not broadcast math over all data vregs).
    scale = w_ref[...].astype(jnp.float32) * inv_std       # (1, C_BLK, 1)
    shift = b_ref[...].astype(jnp.float32) - mean * scale  # (1, C_BLK, 1)

    # Residual is loaded only here (short live range -> no spill pressure).
    # 3 VALU ops per element: mul, add, add.
    o_ref[...] = (x * scale + shift
                  + res_ref[...].astype(jnp.float32)).astype(o_ref.dtype)


def _pick_c_block(C):
    for cb in (32, 16, 8):
        if C % cb == 0:
            return cb
    return C


@functools.partial(jax.jit, donate_argnums=(0,))
def batchnorm_add(x101, x94, weight, bias):
    """x101, x94: (N, C, H, W). Returns BatchNorm2d(x101) (training fwd) + x94."""
    N, C, H, W = x101.shape
    HW = H * W
    C_BLK = _pick_c_block(C)

    # NCHW -> (N, C, H*W): contiguous reshape, no transpose anywhere.
    x3d = x101.reshape(N, C, HW)
    r3d = x94.reshape(N, C, HW)
    w3d = weight.reshape(1, C, 1)
    b3d = bias.reshape(1, C, 1)

    itemsize = jnp.dtype(x101.dtype).itemsize
    cost = pl.CostEstimate(
        flops=8 * N * C * HW,                 # memory-bound elementwise op
        transcendentals=C,                    # one rsqrt per channel
        bytes_accessed=3 * N * C * HW * itemsize,
    )

    grid_spec = pltpu.PrefetchScalarGridSpec(
        num_scalar_prefetch=0,
        grid=(C // C_BLK,),
        in_specs=[
            pl.BlockSpec((N, C_BLK, HW), lambda c: (0, c, 0)),
            pl.BlockSpec((N, C_BLK, HW), lambda c: (0, c, 0)),
            pl.BlockSpec((1, C_BLK, 1), lambda c: (0, c, 0)),
            pl.BlockSpec((1, C_BLK, 1), lambda c: (0, c, 0)),
        ],
        out_specs=pl.BlockSpec((N, C_BLK, HW), lambda c: (0, c, 0)),
    )

    out3d = pl.pallas_call(
        bn_add_kernel,
        out_shape=jax.ShapeDtypeStruct((N, C, HW), x101.dtype),
        grid_spec=grid_spec,
        # Each grid step reads and writes only its own channel block, so
        # aliasing the output onto x's buffer is hazard-free.
        input_output_aliases={0: 0},
        cost_estimate=cost,
        compiler_params=pltpu.CompilerParams(
            dimension_semantics=("parallel",),   # shard channels across v7x's 2 TCs
            vmem_limit_bytes=32 * 1024 * 1024,   # well under v7x 64 MiB physical
        ),
    )(x3d, r3d, w3d, b3d)

    # (N, C, H*W) -> NCHW: contiguous reshape, free.
    return out3d.reshape(N, C, H, W)


if __name__ == "__main__":
    key = jax.random.PRNGKey(0)
    k1, k2 = jax.random.split(key)

    N, C, H, W = 1, 128, 14, 14
    x101 = jax.random.normal(k1, (N, C, H, W), dtype=jnp.float32)
    x94 = jax.random.normal(k2, (N, C, H, W), dtype=jnp.float32)

    # nn.BatchNorm2d(128, affine=True) default init: weight=1, bias=0
    weight = jnp.ones((C,), dtype=jnp.float32)
    bias = jnp.zeros((C,), dtype=jnp.float32)

    # Reference computed BEFORE the kernel call (x101 is donated / consumed
    # in-place by batchnorm_add).  Training-mode BN: biased batch stats.
    mean = jnp.mean(x101, axis=(0, 2, 3), keepdims=True)
    var = jnp.mean((x101 - mean) ** 2, axis=(0, 2, 3), keepdims=True)
    ref = (x101 - mean) / jnp.sqrt(var + EPS) * weight.reshape(1, C, 1, 1) \
          + bias.reshape(1, C, 1, 1) + x94
    ref = jax.block_until_ready(ref)

    out = batchnorm_add(x101, x94, weight, bias)
    out = jax.block_until_ready(out)

    assert out.shape == (N, C, H, W)
    assert jnp.allclose(out, ref, atol=1e-4, rtol=1e-4)

    print("KERNEL_OK")
</pallas_src>

<mosaic_0001>
module attributes {stable_mosaic.version = 11 : i64} {
  func.func @bn_add_kernel(%arg0: i32, %arg1: memref<1x32x196xf32, #tpu.memory_space<vmem>>, %arg2: memref<1x32x196xf32, #tpu.memory_space<vmem>>, %arg3: memref<1x32x1xf32, #tpu.memory_space<vmem>>, %arg4: memref<1x32x1xf32, #tpu.memory_space<vmem>>, %arg5: memref<1x32x196xf32, #tpu.memory_space<vmem>>) attributes {dimension_semantics = [#tpu.dimension_semantics<parallel>], iteration_bounds = array<i64: 4>, scalar_prefetch = 0 : i64, scratch_operands = 0 : i64, tpu.core_type = #tpu.core_type<tc>, window_params = [{transform_indices = @transform_0, window_bounds = array<i64: 1, 32, 196>}, {transform_indices = @transform_1, window_bounds = array<i64: 1, 32, 196>}, {transform_indices = @transform_2, window_bounds = array<i64: 1, 32, 1>}, {transform_indices = @transform_3, window_bounds = array<i64: 1, 32, 1>}, {transform_indices = @transform_4, window_bounds = array<i64: 1, 32, 196>}]} {
    %c0 = arith.constant 0 : index
    %c0_0 = arith.constant 0 : index
    %c0_1 = arith.constant 0 : index
    %0 = vector.load %arg1[%c0, %c0_0, %c0_1] : memref<1x32x196xf32, #tpu.memory_space<vmem>>, vector<1x32x196xf32>
    %cst = arith.constant dense<0.000000e+00> : vector<1x32xf32>
    %1 = vector.multi_reduction <add>, %0, %cst [2] : vector<1x32x196xf32> to vector<1x32xf32>
    %2 = vector.shape_cast %1 : vector<1x32xf32> to vector<1x32x1xf32>
    %cst_2 = arith.constant dense<0.000000e+00> : vector<32x1xf32>
    %3 = vector.multi_reduction <add>, %2, %cst_2 [0] : vector<1x32x1xf32> to vector<32x1xf32>
    %4 = vector.shape_cast %3 : vector<32x1xf32> to vector<1x32x1xf32>
    %5 = arith.mulf %0, %0 : vector<1x32x196xf32>
    %cst_3 = arith.constant dense<0.000000e+00> : vector<1x32xf32>
    %6 = vector.multi_reduction <add>, %5, %cst_3 [2] : vector<1x32x196xf32> to vector<1x32xf32>
    %7 = vector.shape_cast %6 : vector<1x32xf32> to vector<1x32x1xf32>
    %cst_4 = arith.constant dense<0.000000e+00> : vector<32x1xf32>
    %8 = vector.multi_reduction <add>, %7, %cst_4 [0] : vector<1x32x1xf32> to vector<32x1xf32>
    %9 = vector.shape_cast %8 : vector<32x1xf32> to vector<1x32x1xf32>
    %cst_5 = arith.constant 0.00510204071 : f32
    %10 = vector.broadcast %cst_5 : f32 to vector<1x32x1xf32>
    %11 = arith.mulf %4, %10 : vector<1x32x1xf32>
    %cst_6 = arith.constant 0.00510204071 : f32
    %12 = vector.broadcast %cst_6 : f32 to vector<1x32x1xf32>
    %13 = arith.mulf %9, %12 : vector<1x32x1xf32>
    %14 = arith.mulf %11, %11 : vector<1x32x1xf32>
    %15 = arith.subf %13, %14 : vector<1x32x1xf32>
    %cst_7 = arith.constant 0.000000e+00 : f32
    %16 = vector.broadcast %cst_7 : f32 to vector<1x32x1xf32>
    %17 = arith.maximumf %15, %16 : vector<1x32x1xf32>
    %cst_8 = arith.constant 9.99999974E-6 : f32
    %18 = vector.broadcast %cst_8 : f32 to vector<1x32x1xf32>
    %19 = arith.addf %17, %18 : vector<1x32x1xf32>
    %20 = math.rsqrt %19 : vector<1x32x1xf32>
    %c0_9 = arith.constant 0 : index
    %c0_10 = arith.constant 0 : index
    %c0_11 = arith.constant 0 : index
    %21 = vector.load %arg3[%c0_9, %c0_10, %c0_11] : memref<1x32x1xf32, #tpu.memory_space<vmem>>, vector<1x32x1xf32>
    %22 = arith.mulf %21, %20 : vector<1x32x1xf32>
    %c0_12 = arith.constant 0 : index
    %c0_13 = arith.constant 0 : index
    %c0_14 = arith.constant 0 : index
    %23 = vector.load %arg4[%c0_12, %c0_13, %c0_14] : memref<1x32x1xf32, #tpu.memory_space<vmem>>, vector<1x32x1xf32>
    %24 = arith.mulf %11, %22 : vector<1x32x1xf32>
    %25 = arith.subf %23, %24 : vector<1x32x1xf32>
    %26 = vector.broadcast %22 : vector<1x32x1xf32> to vector<1x32x196xf32>
    %27 = arith.mulf %0, %26 : vector<1x32x196xf32>
    %28 = vector.broadcast %25 : vector<1x32x1xf32> to vector<1x32x196xf32>
    %29 = arith.addf %27, %28 : vector<1x32x196xf32>
    %c0_15 = arith.constant 0 : index
    %c0_16 = arith.constant 0 : index
    %c0_17 = arith.constant 0 : index
    %30 = vector.load %arg2[%c0_15, %c0_16, %c0_17] : memref<1x32x196xf32, #tpu.memory_space<vmem>>, vector<1x32x196xf32>
    %31 = arith.addf %29, %30 : vector<1x32x196xf32>
    %c0_18 = arith.constant 0 : index
    %c0_19 = arith.constant 0 : index
    %c0_20 = arith.constant 0 : index
    %32 = vector.load %arg5[%c0_18, %c0_19, %c0_20] : memref<1x32x196xf32, #tpu.memory_space<vmem>>, vector<1x32x196xf32>
    tpu.vector_store %arg5[%c0_18, %c0_19, %c0_20], %31 {strides = array<i32>} : memref<1x32x196xf32, #tpu.memory_space<vmem>>, vector<1x32x196xf32>,
    return
  }
  func.func @transform_0(%arg0: i32) -> (i32, i32, i32) {
    %c0_i32 = arith.constant 0 : i32
    %c0_i32_0 = arith.constant 0 : i32
    %c0_i32_1 = arith.constant 0 : i32
    return %c0_i32, %arg0, %c0_i32_0 : i32, i32, i32
  }
  func.func @transform_1(%arg0: i32) -> (i32, i32, i32) {
    %c0_i32 = arith.constant 0 : i32
    %c0_i32_0 = arith.constant 0 : i32
    %c0_i32_1 = arith.constant 0 : i32
    return %c0_i32, %arg0, %c0_i32_0 : i32, i32, i32
  }
  func.func @transform_2(%arg0: i32) -> (i32, i32, i32) {
    %c0_i32 = arith.constant 0 : i32
    %c0_i32_0 = arith.constant 0 : i32
    %c0_i32_1 = arith.constant 0 : i32
    return %c0_i32, %arg0, %c0_i32_0 : i32, i32, i32
  }
  func.func @transform_3(%arg0: i32) -> (i32, i32, i32) {
    %c0_i32 = arith.constant 0 : i32
    %c0_i32_0 = arith.constant 0 : i32
    %c0_i32_1 = arith.constant 0 : i32
    return %c0_i32, %arg0, %c0_i32_0 : i32, i32, i32
  }
  func.func @transform_4(%arg0: i32) -> (i32, i32, i32) {
    %c0_i32 = arith.constant 0 : i32
    %c0_i32_0 = arith.constant 0 : i32
    %c0_i32_1 = arith.constant 0 : i32
    return %c0_i32, %arg0, %c0_i32_0 : i32, i32, i32
  }
}

</mosaic_0001>

<llo_original>
// kernel: batchnorm_add.1
$region0: #{batchnorm_add.1}
  #allocation0 [shape = 'u32[]', space=smem, size = 0x4, offset = 0x4, fixed_abs, tag = 'smem constant byte address 0x4 - core index']
  #allocation1 [shape = 'u32[144,128]{1,0:T(1,128)}', space=vmem, size = 0x12000, scoped, tag = 'internal scratch']
  %s0 = inlined_call_operand.vmem [shape: f32[1,128,196], index: 0, kind: input, shape index: {}, may-alias: {0,4}]
  %s1 = inlined_call_operand.vmem [shape: f32[1,128,196], index: 1, kind: input, shape index: {}]
  %s2 = inlined_call_operand.vmem [shape: f32[1,128,1], index: 2, kind: input, shape index: {}]
  %s3 = inlined_call_operand.vmem [shape: f32[1,128,1], index: 3, kind: input, shape index: {}]
  %s4 = inlined_call_operand.vmem [shape: f32[1,128,196], index: 4, kind: output, shape index: {}, may-alias: {0,4}]
  %s5 = sld [smem:[#allocation0]]
  $region49: #{batchnorm_add.1} parent=0
    _
  %s7 = ssub.s32 1, %s5
  %s8 = scalar_select 0, %s7, %s5
  loop: start=0, step=1, limit=6
  $region2: #{batchnorm_add.1} parent=0 // loop_pre_header
    _
  $region3: #{batchnorm_add.1} parent=0 // loop_header
    %s10 = sphi 0, %s14
    %p11 = scmp.ge.s32.totalorder %s10, 6
    %s20 = sphi 0, %s22
    %s23 = sphi 0, %s20
    %s24 = sphi 0, %s23
    %s40 = sphi 0, %s24
    %s46 = sphi 0, %s48
    %s49 = sphi 0, %s46
    %s50 = sphi 0, %s49
    %s66 = sphi 0, %s50
    %s72 = sphi 0, %s74
    %s75 = sphi 0, %s72
    %s76 = sphi 0, %s75
    %s92 = sphi 0, %s76
    %s98 = sphi 0, %s100
    %s101 = sphi 0, %s98
    %s102 = sphi 0, %s101
    %s118 = sphi 0, %s102
    %s124 = sphi 0, %s126
    %s127 = sphi 0, %s124
    %s128 = sphi 0, %s127
    %s144 = sphi 0, %s128
  $region4: #{batchnorm_add.1} parent=0 // loop_header_branch
    %13 = sbr.rel (%p11) target = $region8
  $region5: #{batchnorm_add.1} parent=0 // loop_body
    %s15 = ssub.s32 %s10, 1
    %s16 = ssub.s32 %s10, 2
    %s17 = sadd.s32 %s10, 1
    %s18 = ssub.s32 %s10, %s17
    %p19 = scmp.eq.s32.totalorder %s18, 0
    %s21 = sadd.s32 %s20, 1
    %s22 = scalar_select %p19, %s20, %s21
    %p25 = pneg %p19
    %p26 = scmp.eq.s32.totalorder %s10, 3
    %p27 = por %p25, %p26
    %p28 = scmp.ne.s32.totalorder %s20, %s23
    %p29 = scmp.eq.s32.totalorder %s10, 0
    %p30 = por %p28, %p29
    %p31 = scmp.ne.s32.totalorder %s20, %s23
    %p32 = scmp.eq.s32.totalorder %s15, 3
    %p33 = por %p31, %p32
    %p34 = scmp.ne.s32.totalorder %s23, %s24
    %p35 = scmp.eq.s32.totalorder %s15, 0
    %p36 = por %p34, %p35
    %p37 = scmp.ne.s32.totalorder %s23, %s24
    %p38 = scmp.eq.s32.totalorder %s16, 3
    %p39 = por %p37, %p38
    %p41 = scmp.ne.s32.totalorder %s24, %s40
    %p42 = scmp.eq.s32.totalorder %s16, 0
    %p43 = por %p41, %p42
    %s44 = ssub.s32 %s10, %s17
    %p45 = scmp.eq.s32.totalorder %s44, 0
    %s47 = sadd.s32 %s46, 1
    %s48 = scalar_select %p45, %s46, %s47
    %p51 = pneg %p45
    %p52 = scmp.eq.s32.totalorder %s10, 3
    %p53 = por %p51, %p52
    %p54 = scmp.ne.s32.totalorder %s46, %s49
    %p55 = scmp.eq.s32.totalorder %s10, 0
    %p56 = por %p54, %p55
    %p57 = scmp.ne.s32.totalorder %s46, %s49
    %p58 = scmp.eq.s32.totalorder %s15, 3
    %p59 = por %p57, %p58
    %p60 = scmp.ne.s32.totalorder %s49, %s50
    %p61 = scmp.eq.s32.totalorder %s15, 0
    %p62 = por %p60, %p61
    %p63 = scmp.ne.s32.totalorder %s49, %s50
    %p64 = scmp.eq.s32.totalorder %s16, 3
    %p65 = por %p63, %p64
    %p67 = scmp.ne.s32.totalorder %s50, %s66
    %p68 = scmp.eq.s32.totalorder %s16, 0
    %p69 = por %p67, %p68
    %s70 = ssub.s32 %s10, %s17
    %p71 = scmp.eq.s32.totalorder %s70, 0
    %s73 = sadd.s32 %s72, 1
    %s74 = scalar_select %p71, %s72, %s73
    %p77 = pneg %p71
    %p78 = scmp.eq.s32.totalorder %s10, 3
    %p79 = por %p77, %p78
    %p80 = scmp.ne.s32.totalorder %s72, %s75
    %p81 = scmp.eq.s32.totalorder %s10, 0
    %p82 = por %p80, %p81
    %p83 = scmp.ne.s32.totalorder %s72, %s75
    %p84 = scmp.eq.s32.totalorder %s15, 3
    %p85 = por %p83, %p84
    %p86 = scmp.ne.s32.totalorder %s75, %s76
    %p87 = scmp.eq.s32.totalorder %s15, 0
    %p88 = por %p86, %p87
    %p89 = scmp.ne.s32.totalorder %s75, %s76
    %p90 = scmp.eq.s32.totalorder %s16, 3
    %p91 = por %p89, %p90
    %p93 = scmp.ne.s32.totalorder %s76, %s92
    %p94 = scmp.eq.s32.totalorder %s16, 0
    %p95 = por %p93, %p94
    %s96 = ssub.s32 %s10, %s17
    %p97 = scmp.eq.s32.totalorder %s96, 0
    %s99 = sadd.s32 %s98, 1
    %s100 = scalar_select %p97, %s98, %s99
    %p103 = pneg %p97
    %p104 = scmp.eq.s32.totalorder %s10, 3
    %p105 = por %p103, %p104
    %p106 = scmp.ne.s32.totalorder %s98, %s101
    %p107 = scmp.eq.s32.totalorder %s10, 0
    %p108 = por %p106, %p107
    %p109 = scmp.ne.s32.totalorder %s98, %s101
    %p110 = scmp.eq.s32.totalorder %s15, 3
    %p111 = por %p109, %p110
    %p112 = scmp.ne.s32.totalorder %s101, %s102
    %p113 = scmp.eq.s32.totalorder %s15, 0
    %p114 = por %p112, %p113
    %p115 = scmp.ne.s32.totalorder %s101, %s102
    %p116 = scmp.eq.s32.totalorder %s16, 3
    %p117 = por %p115, %p116
    %p119 = scmp.ne.s32.totalorder %s102, %s118
    %p120 = scmp.eq.s32.totalorder %s16, 0
    %p121 = por %p119, %p120
    %s122 = ssub.s32 %s10, %s17
    %p123 = scmp.eq.s32.totalorder %s122, 0
    %s125 = sadd.s32 %s124, 1
    %s126 = scalar_select %p123, %s124, %s125
    %p129 = pneg %p123
    %p130 = scmp.eq.s32.totalorder %s10, 3
    %p131 = por %p129, %p130
    %p132 = scmp.ne.s32.totalorder %s124, %s127
    %p133 = scmp.eq.s32.totalorder %s10, 0
    %p134 = por %p132, %p133
    %p135 = scmp.ne.s32.totalorder %s124, %s127
    %p136 = scmp.eq.s32.totalorder %s15, 3
    %p137 = por %p135, %p136
    %p138 = scmp.ne.s32.totalorder %s127, %s128
    %p139 = scmp.eq.s32.totalorder %s15, 0
    %p140 = por %p138, %p139
    %p141 = scmp.ne.s32.totalorder %s127, %s128
    %p142 = scmp.eq.s32.totalorder %s16, 3
    %p143 = por %p141, %p142
    %p145 = scmp.ne.s32.totalorder %s128, %s144
    %p146 = scmp.eq.s32.totalorder %s16, 0
    %p147 = por %p145, %p146
    %p148 = scmp.le.s32.totalorder 1, %s10
    %p149 = scmp.lt.s32.totalorder %s10, 5
    %p150 = pnand %p148, %p149
    %p151 = pneg %p150
    // Predicated region
    $region9: #{batchnorm_add.1} parent=5 // pred_check
      _
    $region10: #{batchnorm_add.1} parent=5 // pred_check_branch
      %153 = sbr.rel (%p150) target = $region12
    $region11: #{batchnorm_add.1} parent=5 // pred_region
      %s154 = ssub.s32 %s10, 1
    $region12: #{batchnorm_add.1} parent=5 // pred_fallthru
      _
    %p155 = scmp.lt.s32.totalorder %s10, 4
    // Predicated region
    $region13: #{batchnorm_add.1} parent=5 // pred_check
      %p156 = pneg %p155
    $region14: #{batchnorm_add.1} parent=5 // pred_check_branch
      %158 = sbr.rel (%p156) target = $region16
    $region15: #{batchnorm_add.1} parent=5 // pred_region
      // Predicated region
      $region17: #{batchnorm_add.1} parent=15 // pred_check
        %p159 = pneg %p30
      $region18: #{batchnorm_add.1} parent=15 // pred_check_branch
        %161 = sbr.rel (%p159) target = $region20
      $region19: #{batchnorm_add.1} parent=15 // pred_region
        %s162 = smul.u32 4, %s10
        %p163 = scmp.lt.s32.totalorder %s162, 15
        %s164 = scalar_select %p163, %s162, 15
        %s165 = smul.addr %s164, 2
        %s166 = smul.addr %s165, 8
        %s167 = scalar_lea.vmem %s0, %s166
        %s168 = smul.u32 4, %s10
      $region20: #{batchnorm_add.1} parent=15 // pred_fallthru
        _
      // Predicated region
      $region21: #{batchnorm_add.1} parent=15 // pred_check
        %p169 = pneg %p56
      $region22: #{batchnorm_add.1} parent=15 // pred_check_branch
        %171 = sbr.rel (%p169) target = $region24
      $region23: #{batchnorm_add.1} parent=15 // pred_region
        %s172 = smul.u32 4, %s10
        %p173 = scmp.lt.s32.totalorder %s172, 15
        %s174 = scalar_select %p173, %s172, 15
        %s175 = smul.addr %s174, 2
        %s176 = smul.addr %s175, 8
        %s177 = scalar_lea.vmem %s1, %s176
        %s178 = smul.u32 4, %s10
      $region24: #{batchnorm_add.1} parent=15 // pred_fallthru
        _
      // Predicated region
      $region25: #{batchnorm_add.1} parent=15 // pred_check
        %p179 = pneg %p82
      $region26: #{batchnorm_add.1} parent=15 // pred_check_branch
        %181 = sbr.rel (%p179) target = $region28
      $region27: #{batchnorm_add.1} parent=15 // pred_region
        %s182 = smul.u32 4, %s10
        %p183 = scmp.lt.s32.totalorder %s182, 15
        %s184 = scalar_select %p183, %s182, 15
        %s185 = smul.addr %s184, 8
        %s186 = scalar_lea.vmem %s2, %s185
        %s187 = smul.u32 4, %s10
      $region28: #{batchnorm_add.1} parent=15 // pred_fallthru
        _
      // Predicated region
      $region29: #{batchnorm_add.1} parent=15 // pred_check
        %p188 = pneg %p108
      $region30: #{batchnorm_add.1} parent=15 // pred_check_branch
        %190 = sbr.rel (%p188) target = $region32
      $region31: #{batchnorm_add.1} parent=15 // pred_region
        %s191 = smul.u32 4, %s10
        %p192 = scmp.lt.s32.totalorder %s191, 15
        %s193 = scalar_select %p192, %s191, 15
        %s194 = smul.addr %s193, 8
        %s195 = scalar_lea.vmem %s3, %s194
        %s196 = smul.u32 4, %s10
      $region32: #{batchnorm_add.1} parent=15 // pred_fallthru
        _
    $region16: #{batchnorm_add.1} parent=5 // pred_fallthru
      _
    %p197 = scmp.le.s32.totalorder 1, %s10
    %p198 = scmp.lt.s32.totalorder %s10, 5
    %p199 = pnand %p197, %p198
    %p200 = pneg %p199
    // Predicated region
    $region33: #{batchnorm_add.1} parent=5 // pred_check
      _
    $region34: #{batchnorm_add.1} parent=5 // pred_check_branch
      %202 = sbr.rel (%p199) target = $region36
    $region35: #{batchnorm_add.1} parent=5 // pred_region
      %s203 = ssub.s32 %s10, 1
      %s204 = smul.u32 4, %s15
      %p205 = scmp.lt.s32.totalorder %s204, 15
      %s206 = scalar_select %p205, %s204, 15
      %s207 = smul.addr %s206, 2
      %s208 = smul.addr %s207, 8
      %s209 = scalar_lea.vmem %s0, %s208
      %p210 = pneg %p36
      %p211 = pneg %p33
      %s212 = smul.u32 4, %s15
      %p213 = scmp.lt.s32.totalorder %s212, 15
      %s214 = scalar_select %p213, %s212, 15
      %s215 = smul.addr %s214, 2
      %s216 = smul.addr %s215, 8
      %s217 = scalar_lea.vmem %s1, %s216
      %p218 = pneg %p62
      %p219 = pneg %p59
      %s220 = smul.u32 4, %s15
      %p221 = scmp.lt.s32.totalorder %s220, 15
      %s222 = scalar_select %p221, %s220, 15
      %s223 = smul.addr %s222, 8
      %s224 = scalar_lea.vmem %s2, %s223
      %p225 = pneg %p88
      %p226 = pneg %p85
      %s227 = smul.u32 4, %s15
      %p228 = scmp.lt.s32.totalorder %s227, 15
      %s229 = scalar_select %p228, %s227, 15
      %s230 = smul.addr %s229, 8
      %s231 = scalar_lea.vmem %s3, %s230
      %p232 = pneg %p114
      %p233 = pneg %p111
      %p234 = pneg %p140
      %p235 = pneg %p137
      %s236 = smul.u32 4, %s15
      %p237 = scmp.lt.s32.totalorder %s236, 15
      %s238 = scalar_select %p237, %s236, 15
      %s239 = smul.addr %s238, 2
      %s240 = smul.addr %s239, 8
      %s241 = scalar_lea.vmem %s4, %s240
      %s242 = smul.u32 4, %s15
      %p243 = scmp.lt.s32.totalorder %s242, 15
      %s244 = scalar_select %p243, %s242, 15
      %s245 = smul.addr %s244, 2
      %s246 = smul.addr %s245, 8
      %s247 = scalar_lea.vmem %s0, %s246
      %s248 = smul.u32 4, %s15
      %s249 = smul.u32 4, %s15
      %p250 = scmp.lt.s32.totalorder %s249, 15
      %s251 = scalar_select %p250, %s249, 15
      %s252 = smul.addr %s251, 2
      %s253 = smul.addr %s252, 8
      %s254 = scalar_lea.vmem %s1, %s253
      %s255 = smul.u32 4, %s15
      %s256 = smul.u32 4, %s15
      %p257 = scmp.lt.s32.totalorder %s256, 15
      %s258 = scalar_select %p257, %s256, 15
      %s259 = smul.addr %s258, 8
      %s260 = scalar_lea.vmem %s2, %s259
      %s261 = smul.u32 4, %s15
      %s262 = smul.u32 4, %s15
      %p263 = scmp.lt.s32.totalorder %s262, 15
      %s264 = scalar_select %p263, %s262, 15
      %s265 = smul.addr %s264, 8
      %s266 = scalar_lea.vmem %s3, %s265
      %s267 = smul.u32 4, %s15
      %s268 = smul.u32 4, %s15
      %p269 = scmp.lt.s32.totalorder %s268, 15
      %s270 = scalar_select %p269, %s268, 15
      %s271 = smul.addr %s270, 2
      %s272 = smul.addr %s271, 8
      %s273 = scalar_lea.vmem %s4, %s272
      %s274 = smul.u32 4, %s15
      %v275 = vld [vmem:[%s247] sm:$0xff]
      %v276 = vld [vmem:[%s247 + $0x8] sm:$0xff]
      %v277 = vld [vmem:[%s247 + $0x10] sm:$0xff]
      %v278 = vld [vmem:[%s247 + $0x18] sm:$0xff]
      %v279 = vld [vmem:[%s247 + $0x20] sm:$0xff]
      %v280 = vld [vmem:[%s247 + $0x28] sm:$0xff]
      %v281 = vld [vmem:[%s247 + $0x30] sm:$0xff]
      %v282 = vld [vmem:[%s247 + $0x38] sm:$0xff]
      %vm283 = vcmask 556032
      %v284 = vsel %vm283, %v276, 0.0
      %v285 = vadd.f32 %v275, %v284
      %286 = vadd.xlane.f32.xlu0 %v285
      %v287 = vpop.xlane.xlu0 %286
      %v288 = vsel %vm283, %v278, 0.0
      %v289 = vadd.f32 %v277, %v288
      %290 = vadd.xlane.f32.xlu0 %v289
      %v291 = vpop.xlane.xlu0 %290
      %v292 = vsel %vm283, %v280, 0.0
      %v293 = vadd.f32 %v279, %v292
      %294 = vadd.xlane.f32.xlu0 %v293
      %v295 = vpop.xlane.xlu0 %294
      %v296 = vsel %vm283, %v282, 0.0
      %v297 = vadd.f32 %v281, %v296
      %298 = vadd.xlane.f32.xlu0 %v297
      %v299 = vpop.xlane.xlu0 %298
      %v300 = vadd.f32 %v287, 0.0
      %v301 = vadd.f32 %v291, 0.0
      %v302 = vadd.f32 %v295, 0.0
      %v303 = vadd.f32 %v299, 0.0
      %v304 = vmul.f32 %v275, %v275
      %v305 = vmul.f32 %v276, %v276
      %v306 = vmul.f32 %v277, %v277
      %v307 = vmul.f32 %v278, %v278
      %v308 = vmul.f32 %v279, %v279
      %v309 = vmul.f32 %v280, %v280
      %v310 = vmul.f32 %v281, %v281
      %v311 = vmul.f32 %v282, %v282
      %v312 = vsel %vm283, %v305, 0.0
      %v313 = vadd.f32 %v304, %v312
      %314 = vadd.xlane.f32.xlu0 %v313
      %v315 = vpop.xlane.xlu0 %314
      %v316 = vsel %vm283, %v307, 0.0
      %v317 = vadd.f32 %v306, %v316
      %318 = vadd.xlane.f32.xlu0 %v317
      %v319 = vpop.xlane.xlu0 %318
      %v320 = vsel %vm283, %v309, 0.0
      %v321 = vadd.f32 %v308, %v320
      %322 = vadd.xlane.f32.xlu0 %v321
      %v323 = vpop.xlane.xlu0 %322
      %v324 = vsel %vm283, %v311, 0.0
      %v325 = vadd.f32 %v310, %v324
      %326 = vadd.xlane.f32.xlu0 %v325
      %v327 = vpop.xlane.xlu0 %326
      %v328 = vadd.f32 %v315, 0.0
      %v329 = vadd.f32 %v319, 0.0
      %v330 = vadd.f32 %v323, 0.0
      %v331 = vadd.f32 %v327, 0.0
      %v332 = vmul.f32 %v300, 0.0051020407
      %v333 = vmul.f32 %v301, 0.0051020407
      %v334 = vmul.f32 %v302, 0.0051020407
      %v335 = vmul.f32 %v303, 0.0051020407
      %v336 = vmul.f32 %v328, 0.0051020407
      %v337 = vmul.f32 %v329, 0.0051020407
      %v338 = vmul.f32 %v330, 0.0051020407
      %v339 = vmul.f32 %v331, 0.0051020407
      %v340 = vmul.f32 %v332, %v332
      %v341 = vmul.f32 %v333, %v333
      %v342 = vmul.f32 %v334, %v334
      %v343 = vmul.f32 %v335, %v335
      %v344 = vsub.f32 %v336, %v340
      %v345 = vsub.f32 %v337, %v341
      %v346 = vsub.f32 %v338, %v342
      %v347 = vsub.f32 %v339, %v343
      %v348 = vmax.f32 %v344, 0.0
      %v349 = vmax.f32 %v345, 0.0
      %v350 = vmax.f32 %v346, 0.0
      %v351 = vmax.f32 %v347, 0.0
      %v352 = vadd.f32 %v348, 1e-05
      %v353 = vadd.f32 %v349, 1e-05
      %v354 = vadd.f32 %v350, 1e-05
      %v355 = vadd.f32 %v351, 1e-05
      %v356 = vrsqrt.pop %v352
      %v357 = vrsqrt.pop %v353
      %v358 = vrsqrt.pop %v354
      %v359 = vrsqrt.pop %v355
      %v360 = vld [vmem:[%s260] sm:$0xff]
      %v361 = vld [vmem:[%s260 + $0x8] sm:$0xff]
      %v362 = vld [vmem:[%s260 + $0x10] sm:$0xff]
      %v363 = vld [vmem:[%s260 + $0x18] sm:$0xff]
      %v364 = vmul.f32 %v360, %v356
      %v365 = vmul.f32 %v361, %v357
      %v366 = vmul.f32 %v362, %v358
      %v367 = vmul.f32 %v363, %v359
      %v368 = vld [vmem:[%s266] sm:$0xff]
      %v369 = vld [vmem:[%s266 + $0x8] sm:$0xff]
      %v370 = vld [vmem:[%s266 + $0x10] sm:$0xff]
      %v371 = vld [vmem:[%s266 + $0x18] sm:$0xff]
      %v372 = vmul.f32 %v332, %v364
      %v373 = vmul.f32 %v333, %v365
      %v374 = vmul.f32 %v334, %v366
      %v375 = vmul.f32 %v335, %v367
      %v376 = vsub.f32 %v368, %v372
      %v377 = vsub.f32 %v369, %v373
      %v378 = vsub.f32 %v370, %v374
      %v379 = vsub.f32 %v371, %v375
      %381 = vset.pattern.permute.xlu0 0
      %382 = vperm.xlu0 %381, %v364
      %v383 = vpop.permute.xlu0 %382
      %386 = vset.pattern.permute.xlu0 0
      %387 = vperm.xlu0 %386, %v365
      %v388 = vpop.permute.xlu0 %387
      %391 = vset.pattern.permute.xlu0 0
      %392 = vperm.xlu0 %391, %v366
      %v393 = vpop.permute.xlu0 %392
      %396 = vset.pattern.permute.xlu0 0
      %397 = vperm.xlu0 %396, %v367
      %v398 = vpop.permute.xlu0 %397
      %v400 = vmul.f32 %v275, %v383
      %v401 = vmul.f32 %v276, %v383
      %v402 = vmul.f32 %v277, %v388
      %v403 = vmul.f32 %v278, %v388
      %v404 = vmul.f32 %v279, %v393
      %v405 = vmul.f32 %v280, %v393
      %v406 = vmul.f32 %v281, %v398
      %v407 = vmul.f32 %v282, %v398
      %409 = vset.pattern.permute.xlu0 0
      %410 = vperm.xlu0 %409, %v376
      %v411 = vpop.permute.xlu0 %410
      %414 = vset.pattern.permute.xlu0 0
      %415 = vperm.xlu0 %414, %v377
      %v416 = vpop.permute.xlu0 %415
      %419 = vset.pattern.permute.xlu0 0
      %420 = vperm.xlu0 %419, %v378
      %v421 = vpop.permute.xlu0 %420
      %424 = vset.pattern.permute.xlu0 0
      %425 = vperm.xlu0 %424, %v379
      %v426 = vpop.permute.xlu0 %425
      %v428 = vadd.f32 %v400, %v411
      %v429 = vadd.f32 %v401, %v411
      %v430 = vadd.f32 %v402, %v416
      %v431 = vadd.f32 %v403, %v416
      %v432 = vadd.f32 %v404, %v421
      %v433 = vadd.f32 %v405, %v421
      %v434 = vadd.f32 %v406, %v426
      %v435 = vadd.f32 %v407, %v426
      %v436 = vld [vmem:[%s254] sm:$0xff]
      %v437 = vld [vmem:[%s254 + $0x8] sm:$0xff]
      %v438 = vld [vmem:[%s254 + $0x10] sm:$0xff]
      %v439 = vld [vmem:[%s254 + $0x18] sm:$0xff]
      %v440 = vld [vmem:[%s254 + $0x20] sm:$0xff]
      %v441 = vld [vmem:[%s254 + $0x28] sm:$0xff]
      %v442 = vld [vmem:[%s254 + $0x30] sm:$0xff]
      %v443 = vld [vmem:[%s254 + $0x38] sm:$0xff]
      %v444 = vadd.f32 %v428, %v436
      %v445 = vadd.f32 %v429, %v437
      %v446 = vadd.f32 %v430, %v438
      %v447 = vadd.f32 %v431, %v439
      %v448 = vadd.f32 %v432, %v440
      %v449 = vadd.f32 %v433, %v441
      %v450 = vadd.f32 %v434, %v442
      %v451 = vadd.f32 %v435, %v443
      %452 = vst [vmem:[%s273] sm:$0xff] %v444
      %453 = vst.msk [vmem:[%s273 + $0x8] sm:$0xff] %vm283, %v445
      %454 = vst [vmem:[%s273 + $0x10] sm:$0xff] %v446
      %455 = vst.msk [vmem:[%s273 + $0x18] sm:$0xff] %vm283, %v447
      %456 = vst [vmem:[%s273 + $0x20] sm:$0xff] %v448
      %457 = vst.msk [vmem:[%s273 + $0x28] sm:$0xff] %vm283, %v449
      %458 = vst [vmem:[%s273 + $0x30] sm:$0xff] %v450
      %459 = vst.msk [vmem:[%s273 + $0x38] sm:$0xff] %vm283, %v451
      %s460 = smul.u32 4, %s15
      %p461 = scmp.lt.s32.totalorder %s460, 15
      %s462 = scalar_select %p461, %s460, 15
      %s463 = smul.addr %s462, 2
      %s464 = smul.addr %s463, 8
      %s465 = scalar_lea.vmem %s4, %s464
      // Predicated region
      $region37: #{batchnorm_add.1} parent=35 // pred_check
        %p466 = pneg %p137
      $region38: #{batchnorm_add.1} parent=35 // pred_check_branch
        %468 = sbr.rel (%p466) target = $region40
      $region39: #{batchnorm_add.1} parent=35 // pred_region
        %s469 = smul.u32 4, %s15
      $region40: #{batchnorm_add.1} parent=35 // pred_fallthru
        _
    $region36: #{batchnorm_add.1} parent=5 // pred_fallthru
      _
    %p470 = scmp.le.s32.totalorder 2, %s10
    // Predicated region
    $region41: #{batchnorm_add.1} parent=5 // pred_check
      %p471 = pneg %p470
    $region42: #{batchnorm_add.1} parent=5 // pred_check_branch
      %473 = sbr.rel (%p471) target = $region44
    $region43: #{batchnorm_add.1} parent=5 // pred_region
      %s474 = ssub.s32 %s10, 2
      // Predicated region
      $region45: #{batchnorm_add.1} parent=43 // pred_check
        %p475 = pneg %p143
      $region46: #{batchnorm_add.1} parent=43 // pred_check_branch
        %477 = sbr.rel (%p475) target = $region48
      $region47: #{batchnorm_add.1} parent=43 // pred_region
        %s478 = smul.u32 4, %s16
        %p479 = scmp.lt.s32.totalorder %s478, 15
        %s480 = scalar_select %p479, %s478, 15
        %s481 = smul.addr %s480, 2
        %s482 = smul.addr %s481, 8
        %s483 = scalar_lea.vmem %s4, %s482
      $region48: #{batchnorm_add.1} parent=43 // pred_fallthru
        _
    $region44: #{batchnorm_add.1} parent=5 // pred_fallthru
      _
  $region6: #{batchnorm_add.1} parent=0 // loop_footer
    %s14 = sadd.s32 1, %s10
  $region7: #{batchnorm_add.1} parent=0 // loop_footer_branch
    %9 = sbr.rel target = $region3
  $region8: #{batchnorm_add.1} parent=0 // loop_exit
    _

</llo_original>
